<compile_context>
chip_gen: v5e
topology: v5e:2x2
jax: 0.10.0
libtpu: 0.0.40
codegen_flags: <defaults>
</compile_context>

<pallas_src>
import jax
import jax.numpy as jnp
from jax.experimental import pallas as pl
from jax.experimental.pallas import tpu as pltpu


def vq_kernel(z_ref, w_in_ref, b_in_ref, w_sim_ref, b_sim_ref, cb_t_ref,
              w_out_ref, b_out_ref, zq_ref, loss_ref, idx_ref):
    z = z_ref[0]                                  # (Cin, tT) f32, T on lanes

    # Fused in_proj + normalized-codebook similarity (contraction over Cin):
    #   sim = c_n @ (w_in @ z + b_in) == (c_n @ w_in) @ z + (c_n @ b_in)
    # The dropped 1/||z_e|| per-column factor is positive -> argmax unchanged.
    sim = jnp.dot(w_sim_ref[...], z,
                  preferred_element_type=jnp.float32) + b_sim_ref[...]   # (K, tT)

    K = sim.shape[0]
    max_sim = jnp.max(sim, axis=0, keepdims=True)                  # (1, tT)
    k_iota = jax.lax.broadcasted_iota(jnp.int32, (K, 1), 0)        # (K, 1) column iota
    # First-occurrence tie-break (matches torch (-dist).max(1)[1]).
    idx = jnp.min(jnp.where(sim == max_sim, k_iota, K), axis=0,
                  keepdims=True)                                   # (1, tT) int32

    # Codebook gather as one-hot matmul on the MXU; (D, K) lane-dense LHS.
    onehot = jnp.where(k_iota == idx, 1.0, 0.0)                    # (K, tT) f32
    z_q = jnp.dot(cb_t_ref[...], onehot,
                  preferred_element_type=jnp.float32)              # (D, tT)

    # z_e is only needed for the loss (commitment == codebook loss in forward).
    z_e = jnp.dot(w_in_ref[...], z,
                  preferred_element_type=jnp.float32) + b_in_ref[...]    # (D, tT)
    diff = z_e - z_q
    loss_ref[0] = jnp.sum(diff * diff, axis=0, keepdims=True)      # (1, tT) per-column SSE

    # Lane-dense int32 index store.
    idx_ref[0] = idx

    # Straight-through forward value is z_q; out_proj = (Cin,D)@(D,tT)+bias.
    z_out = jnp.dot(w_out_ref[...], z_q,
                    preferred_element_type=jnp.float32) + b_out_ref[...]  # (Cin, tT)
    zq_ref[0] = z_out.astype(zq_ref.dtype)


def _round_up(x, m):
    return (x + m - 1) // m * m


def _vmem_capacity_bytes():
    try:
        return int(pltpu.get_tpu_info().vmem_capacity_bytes)
    except Exception:
        return 64 * 1024 * 1024   # conservative: v7x per-TensorCore VMEM


def _choose_t_tile(t_padded_128, K):
    """Largest T tile (multiple of 128, <= 1024) such that ~4 live (K, tT) f32
    temporaries (sim / select / onehot / slack) fit a fraction of VMEM."""
    budget = max(2 * 1024 * 1024, _vmem_capacity_bytes() // 8)
    cap = budget // (4 * 4 * max(K, 1))
    cap = max(128, (cap // 128) * 128)
    return min(t_padded_128, min(1024, cap))


def _vmem_limit_bytes(Cin, D, K, tT):
    f32 = 4
    streams = 2 * 2 * Cin * tT * f32              # z in + z_out, double-buffered
    streams += 2 * 2 * 2 * tT * f32               # idx + loss columns, double-buffered
    resident = 2 * (D * Cin + D + K * Cin + K + D * K + Cin * D + Cin) * f32
    temps = 4 * K * tT * f32                      # in-kernel (K, tT) temporaries
    est = streams + resident + temps + (4 << 20)  # margin
    return int(min(64 << 20, max(16 << 20, est)))


def vector_quantize_forward(z, params, stride=1):
    """z: (B, input_dim, T) float32, PyTorch NCL layout (kept end-to-end)."""
    w_in, b_in = params["w_in"], params["b_in"]        # (D, Cin), (D,)
    w_out, b_out = params["w_out"], params["b_out"]    # (Cin, D), (Cin,)
    codebook = params["codebook"]                      # (K, D)

    B, Cin, T = z.shape
    if stride > 1:
        # TODO(synk): stride>1 avg_pool1d / repeat_interleave handled in plain-JAX glue.
        z = z.reshape(B, Cin, T // stride, stride).mean(-1)
    Tp = z.shape[-1]
    K, D = codebook.shape

    # Loop-invariant precompute (single XLA ops; results stay VMEM-resident via
    # constant index_maps):
    #   c_n   : L2-normalized codebook (only consumed through the fused weights)
    #   W_sim = c_n @ w_in  (K, Cin),  b_sim = c_n @ b_in  (K, 1)
    #   cb_t  = codebook^T  (D, K)   lane-dense one-hot-gather LHS
    c_n = codebook * jax.lax.rsqrt(
        jnp.maximum(jnp.sum(codebook * codebook, axis=-1, keepdims=True), 1e-24))
    w_sim = jnp.dot(c_n, w_in)                         # (K, Cin)
    b_sim = jnp.dot(c_n, b_in)[:, None]                # (K, 1)
    cb_t = codebook.T                                  # (D, K)

    # Pad T so every tile is a full multiple of 128 lanes (unmasked stores);
    # padded columns are sliced off (and excluded from the loss) afterwards.
    t128 = _round_up(Tp, 128)
    tT = _choose_t_tile(t128, K)
    Tpad = _round_up(Tp, tT)
    if Tpad != Tp:
        z = jnp.pad(z, ((0, 0), (0, 0), (0, Tpad - Tp)))
    nT = Tpad // tT

    out_shape = (
        jax.ShapeDtypeStruct((B, Cin, Tpad), jnp.float32),   # projected z_q (NCL)
        jax.ShapeDtypeStruct((B, 1, Tpad), jnp.float32),     # per-column sum_D (z_e-z_q)^2
        jax.ShapeDtypeStruct((B, 1, Tpad), jnp.int32),       # indices (lane-dense)
    )

    grid_spec = pltpu.PrefetchScalarGridSpec(
        num_scalar_prefetch=0,
        grid=(B, nT),
        in_specs=[
            # (small-K mem-bound regime could add pipeline_mode=pl.Buffered(3) here)
            pl.BlockSpec((1, Cin, tT), lambda b, t: (b, 0, t)),   # z tile
            pl.BlockSpec((D, Cin), lambda b, t: (0, 0)),          # in_proj weight
            pl.BlockSpec((D, 1), lambda b, t: (0, 0)),            # in_proj bias
            pl.BlockSpec((K, Cin), lambda b, t: (0, 0)),          # fused sim weight
            pl.BlockSpec((K, 1), lambda b, t: (0, 0)),            # fused sim bias
            pl.BlockSpec((D, K), lambda b, t: (0, 0)),            # codebook^T
            pl.BlockSpec((Cin, D), lambda b, t: (0, 0)),          # out_proj weight
            pl.BlockSpec((Cin, 1), lambda b, t: (0, 0)),          # out_proj bias
        ],
        out_specs=[
            pl.BlockSpec((1, Cin, tT), lambda b, t: (b, 0, t)),
            pl.BlockSpec((1, 1, tT), lambda b, t: (b, 0, t)),     # per-column loss partials
            pl.BlockSpec((1, 1, tT), lambda b, t: (b, 0, t)),
        ],
    )

    fn = pl.pallas_call(
        vq_kernel,
        out_shape=out_shape,
        grid_spec=grid_spec,
        compiler_params=pltpu.CompilerParams(
            dimension_semantics=("parallel", "parallel"),
            vmem_limit_bytes=_vmem_limit_bytes(Cin, D, K, tT)),
    )

    z_out, loss_cols, idx = fn(z, w_in, b_in[:, None], w_sim, b_sim, cb_t,
                               w_out, b_out[:, None])

    z_out = z_out[:, :, :Tp]
    idx = idx[:, 0, :Tp]
    loss = jnp.sum(loss_cols[:, 0, :Tp], axis=-1) / jnp.float32(Tp * D)
    commit = loss
    cbl = loss   # identical forward values; only gradients would differ (forward-only kernel)
    if stride > 1:
        z_out = jnp.repeat(z_out, stride, axis=-1)       # repeat_interleave glue
    return z_out, commit, cbl, idx


# ---------------- deterministic parameter init (weight_norm Conv1d, Embedding) ----------------
def wn_conv1d_params(key, out_ch, in_ch):
    kv, kg, kb = jax.random.split(key, 3)
    v = 0.2 * jax.random.normal(kv, (out_ch, in_ch, 1), dtype=jnp.float32)
    norm = jnp.sqrt(jnp.sum(v * v, axis=(1, 2), keepdims=True))
    g = norm * (1.0 + 0.05 * jax.random.normal(kg, norm.shape, dtype=jnp.float32))
    w = (g * v / jnp.maximum(norm, 1e-12))[:, :, 0]    # effective weight (out, in)
    b = 0.1 * jax.random.normal(kb, (out_ch,), dtype=jnp.float32)
    return w, b


# ---------------- pure-JAX reference (mirrors the PyTorch forward) ----------------
def reference_forward(z, params, stride=1):
    w_in, b_in = params["w_in"], params["b_in"]
    w_out, b_out = params["w_out"], params["b_out"]
    codebook = params["codebook"]
    B, C, T = z.shape
    if stride > 1:
        z = z.reshape(B, C, T // stride, stride).mean(-1)
    z_e = jnp.einsum("bct,dc->bdt", z, w_in) + b_in[None, :, None]   # (B, D, Tp)
    D = z_e.shape[1]
    lat = jnp.transpose(z_e, (0, 2, 1)).reshape(-1, D)               # (B*Tp, D)

    def l2n(x):
        return x / jnp.maximum(jnp.linalg.norm(x, axis=1, keepdims=True), 1e-12)

    e = l2n(lat)
    c = l2n(codebook)
    dist = (e * e).sum(1, keepdims=True) - 2 * e @ c.T + (c * c).sum(1, keepdims=True).T
    idx = jnp.argmax(-dist, axis=1).reshape(z.shape[0], -1)
    z_q = jnp.transpose(codebook[idx], (0, 2, 1))                    # (B, D, Tp)
    commit = jnp.mean((z_e - z_q) ** 2, axis=(1, 2))
    cbl = commit
    out = jnp.einsum("bdt,cd->bct", z_q, w_out) + b_out[None, :, None]
    if stride > 1:
        out = jnp.repeat(out, stride, axis=-1)
    return out, commit, cbl, idx


if __name__ == "__main__":
    # Small shapes consistent with the module: B=2, input_dim=32, T=16,
    # codebook_size=64, codebook_dim=8, stride=1.
    B, input_dim, T = 2, 32, 16
    codebook_size, codebook_dim, stride = 64, 8, 1

    key = jax.random.PRNGKey(0)
    kz, kin, kout, kcb = jax.random.split(key, 4)

    w_in, b_in = wn_conv1d_params(kin, codebook_dim, input_dim)
    w_out, b_out = wn_conv1d_params(kout, input_dim, codebook_dim)
    codebook = jax.random.normal(kcb, (codebook_size, codebook_dim), dtype=jnp.float32)
    params = {"w_in": w_in, "b_in": b_in, "w_out": w_out, "b_out": b_out,
              "codebook": codebook}

    z = jax.random.normal(kz, (B, input_dim, T), dtype=jnp.float32)

    z_q, commit, cbl, idx = jax.block_until_ready(
        vector_quantize_forward(z, params, stride=stride))

    z_q_ref, commit_ref, cbl_ref, idx_ref = jax.block_until_ready(
        reference_forward(z, params, stride=stride))

    assert z_q.shape == (B, input_dim, T) and z_q.dtype == jnp.float32
    assert commit.shape == (B,) and cbl.shape == (B,)
    assert idx.shape == (B, T)
    assert bool(jnp.all(idx == idx_ref))
    assert bool(jnp.allclose(z_q, z_q_ref, rtol=1e-4, atol=1e-4))
    assert bool(jnp.allclose(commit, commit_ref, rtol=1e-4, atol=1e-4))
    assert bool(jnp.allclose(cbl, cbl_ref, rtol=1e-4, atol=1e-4))

    print("KERNEL_OK")
</pallas_src>

<mosaic_0001>
module attributes {stable_mosaic.version = 11 : i64} {
  func.func @vq_kernel(%arg0: i32, %arg1: i32, %arg2: memref<1x32x128xf32, #tpu.memory_space<vmem>>, %arg3: memref<8x32xf32, #tpu.memory_space<vmem>>, %arg4: memref<8x1xf32, #tpu.memory_space<vmem>>, %arg5: memref<64x32xf32, #tpu.memory_space<vmem>>, %arg6: memref<64x1xf32, #tpu.memory_space<vmem>>, %arg7: memref<8x64xf32, #tpu.memory_space<vmem>>, %arg8: memref<32x8xf32, #tpu.memory_space<vmem>>, %arg9: memref<32x1xf32, #tpu.memory_space<vmem>>, %arg10: memref<1x32x128xf32, #tpu.memory_space<vmem>>, %arg11: memref<1x1x128xf32, #tpu.memory_space<vmem>>, %arg12: memref<1x1x128xi32, #tpu.memory_space<vmem>>) attributes {dimension_semantics = [#tpu.dimension_semantics<parallel>, #tpu.dimension_semantics<parallel>], iteration_bounds = array<i64: 2, 1>, scalar_prefetch = 0 : i64, scratch_operands = 0 : i64, tpu.core_type = #tpu.core_type<tc>, window_params = [{transform_indices = @transform_0, window_bounds = array<i64: 1, 32, 128>}, {pipeline_mode = #tpu.pipeline_mode<synchronous>, transform_indices = @transform_1, window_bounds = array<i64: 8, 32>}, {pipeline_mode = #tpu.pipeline_mode<synchronous>, transform_indices = @transform_2, window_bounds = array<i64: 8, 1>}, {pipeline_mode = #tpu.pipeline_mode<synchronous>, transform_indices = @transform_3, window_bounds = array<i64: 64, 32>}, {pipeline_mode = #tpu.pipeline_mode<synchronous>, transform_indices = @transform_4, window_bounds = array<i64: 64, 1>}, {pipeline_mode = #tpu.pipeline_mode<synchronous>, transform_indices = @transform_5, window_bounds = array<i64: 8, 64>}, {pipeline_mode = #tpu.pipeline_mode<synchronous>, transform_indices = @transform_6, window_bounds = array<i64: 32, 8>}, {pipeline_mode = #tpu.pipeline_mode<synchronous>, transform_indices = @transform_7, window_bounds = array<i64: 32, 1>}, {transform_indices = @transform_8, window_bounds = array<i64: 1, 32, 128>}, {transform_indices = @transform_9, window_bounds = array<i64: 1, 1, 128>}, {transform_indices = @transform_10, window_bounds = array<i64: 1, 1, 128>}]} {
    %c0 = arith.constant 0 : index
    %c0_0 = arith.constant 0 : index
    %c0_1 = arith.constant 0 : index
    %0 = vector.load %arg2[%c0, %c0_0, %c0_1] : memref<1x32x128xf32, #tpu.memory_space<vmem>>, vector<1x32x128xf32>
    %1 = vector.shape_cast %0 : vector<1x32x128xf32> to vector<32x128xf32>
    %c0_2 = arith.constant 0 : index
    %c0_3 = arith.constant 0 : index
    %2 = vector.load %arg5[%c0_2, %c0_3] : memref<64x32xf32, #tpu.memory_space<vmem>>, vector<64x32xf32>
    %cst = arith.constant dense<0.000000e+00> : vector<64x128xf32>
    %3 = tpu.matmul %2, %1, %cst {dimension_numbers = #tpu.dot_dimension_numbers<[1], [0], [0], [1], [0, 0, 1, 1], [], []>} : vector<64x32xf32>, vector<32x128xf32>, vector<64x128xf32> -> vector<64x128xf32>
    %c0_4 = arith.constant 0 : index
    %c0_5 = arith.constant 0 : index
    %4 = vector.load %arg6[%c0_4, %c0_5] : memref<64x1xf32, #tpu.memory_space<vmem>>, vector<64x1xf32>
    %5 = vector.broadcast %4 : vector<64x1xf32> to vector<64x128xf32>
    %6 = arith.addf %3, %5 : vector<64x128xf32>
    %cst_6 = arith.constant dense<0xFF800000> : vector<128xf32>
    %7 = vector.multi_reduction <maximumf>, %6, %cst_6 [0] : vector<64x128xf32> to vector<128xf32>
    %8 = vector.shape_cast %7 : vector<128xf32> to vector<1x128xf32>
    %9 = tpu.iota {dimensions = array<i32: 0>} : vector<64x1xi32>
    %10 = vector.broadcast %8 : vector<1x128xf32> to vector<64x128xf32>
    %11 = arith.cmpf oeq, %6, %10 : vector<64x128xf32>
    %c64_i32 = arith.constant 64 : i32
    %12 = vector.shape_cast %9 : vector<64x1xi32> to vector<64x1xi32>
    %13 = vector.broadcast %12 : vector<64x1xi32> to vector<64x128xi32>
    %14 = vector.broadcast %c64_i32 : i32 to vector<64x128xi32>
    %15 = arith.select %11, %13, %14 : vector<64x128xi1>, vector<64x128xi32>
    %cst_7 = arith.constant dense<2147483647> : vector<128xi32>
    %16 = vector.multi_reduction <minsi>, %15, %cst_7 [0] : vector<64x128xi32> to vector<128xi32>
    %17 = vector.shape_cast %16 : vector<128xi32> to vector<1x128xi32>
    %18 = vector.broadcast %9 : vector<64x1xi32> to vector<64x128xi32>
    %19 = vector.broadcast %17 : vector<1x128xi32> to vector<64x128xi32>
    %20 = arith.cmpi eq, %18, %19 : vector<64x128xi32>
    %cst_8 = arith.constant 1.000000e+00 : f32
    %cst_9 = arith.constant 0.000000e+00 : f32
    %21 = vector.broadcast %cst_8 : f32 to vector<64x128xf32>
    %22 = vector.broadcast %cst_9 : f32 to vector<64x128xf32>
    %23 = arith.select %20, %21, %22 : vector<64x128xi1>, vector<64x128xf32>
    %c0_10 = arith.constant 0 : index
    %c0_11 = arith.constant 0 : index
    %24 = vector.load %arg7[%c0_10, %c0_11] : memref<8x64xf32, #tpu.memory_space<vmem>>, vector<8x64xf32>
    %cst_12 = arith.constant dense<0.000000e+00> : vector<8x128xf32>
    %25 = tpu.matmul %24, %23, %cst_12 {dimension_numbers = #tpu.dot_dimension_numbers<[1], [0], [0], [1], [0, 0, 1, 1], [], []>} : vector<8x64xf32>, vector<64x128xf32>, vector<8x128xf32> -> vector<8x128xf32>
    %c0_13 = arith.constant 0 : index
    %c0_14 = arith.constant 0 : index
    %26 = vector.load %arg3[%c0_13, %c0_14] : memref<8x32xf32, #tpu.memory_space<vmem>>, vector<8x32xf32>
    %cst_15 = arith.constant dense<0.000000e+00> : vector<8x128xf32>
    %27 = tpu.matmul %26, %1, %cst_15 {dimension_numbers = #tpu.dot_dimension_numbers<[1], [0], [0], [1], [0, 0, 1, 1], [], []>} : vector<8x32xf32>, vector<32x128xf32>, vector<8x128xf32> -> vector<8x128xf32>
    %c0_16 = arith.constant 0 : index
    %c0_17 = arith.constant 0 : index
    %28 = vector.load %arg4[%c0_16, %c0_17] : memref<8x1xf32, #tpu.memory_space<vmem>>, vector<8x1xf32>
    %29 = vector.broadcast %28 : vector<8x1xf32> to vector<8x128xf32>
    %30 = arith.addf %27, %29 : vector<8x128xf32>
    %31 = arith.subf %30, %25 : vector<8x128xf32>
    %32 = arith.mulf %31, %31 : vector<8x128xf32>
    %cst_18 = arith.constant dense<0.000000e+00> : vector<128xf32>
    %33 = vector.multi_reduction <add>, %32, %cst_18 [0] : vector<8x128xf32> to vector<128xf32>
    %34 = vector.shape_cast %33 : vector<128xf32> to vector<1x128xf32>
    %c0_19 = arith.constant 0 : index
    %c0_20 = arith.constant 0 : index
    %c0_21 = arith.constant 0 : index
    %35 = vector.load %arg11[%c0_19, %c0_20, %c0_21] : memref<1x1x128xf32, #tpu.memory_space<vmem>>, vector<1x1x128xf32>
    %36 = vector.shape_cast %35 : vector<1x1x128xf32> to vector<1x128xf32>
    %37 = vector.shape_cast %34 : vector<1x128xf32> to vector<1x1x128xf32>
    tpu.vector_store %arg11[%c0_19, %c0_20, %c0_21], %37 {strides = array<i32>} : memref<1x1x128xf32, #tpu.memory_space<vmem>>, vector<1x1x128xf32>,
    %c0_22 = arith.constant 0 : index
    %c0_23 = arith.constant 0 : index
    %c0_24 = arith.constant 0 : index
    %38 = vector.load %arg12[%c0_22, %c0_23, %c0_24] : memref<1x1x128xi32, #tpu.memory_space<vmem>>, vector<1x1x128xi32>
    %39 = vector.shape_cast %38 : vector<1x1x128xi32> to vector<1x128xi32>
    %40 = vector.shape_cast %17 : vector<1x128xi32> to vector<1x1x128xi32>
    tpu.vector_store %arg12[%c0_22, %c0_23, %c0_24], %40 {strides = array<i32>} : memref<1x1x128xi32, #tpu.memory_space<vmem>>, vector<1x1x128xi32>,
    %c0_25 = arith.constant 0 : index
    %c0_26 = arith.constant 0 : index
    %41 = vector.load %arg8[%c0_25, %c0_26] : memref<32x8xf32, #tpu.memory_space<vmem>>, vector<32x8xf32>
    %cst_27 = arith.constant dense<0.000000e+00> : vector<32x128xf32>
    %42 = tpu.matmul %41, %25, %cst_27 {dimension_numbers = #tpu.dot_dimension_numbers<[1], [0], [0], [1], [0, 0, 1, 1], [], []>} : vector<32x8xf32>, vector<8x128xf32>, vector<32x128xf32> -> vector<32x128xf32>
    %c0_28 = arith.constant 0 : index
    %c0_29 = arith.constant 0 : index
    %43 = vector.load %arg9[%c0_28, %c0_29] : memref<32x1xf32, #tpu.memory_space<vmem>>, vector<32x1xf32>
    %44 = vector.broadcast %43 : vector<32x1xf32> to vector<32x128xf32>
    %45 = arith.addf %42, %44 : vector<32x128xf32>
    %c0_30 = arith.constant 0 : index
    %c0_31 = arith.constant 0 : index
    %c0_32 = arith.constant 0 : index
    %46 = vector.load %arg10[%c0_30, %c0_31, %c0_32] : memref<1x32x128xf32, #tpu.memory_space<vmem>>, vector<1x32x128xf32>
    %47 = vector.shape_cast %46 : vector<1x32x128xf32> to vector<32x128xf32>
    %48 = vector.shape_cast %45 : vector<32x128xf32> to vector<1x32x128xf32>
    tpu.vector_store %arg10[%c0_30, %c0_31, %c0_32], %48 {strides = array<i32>} : memref<1x32x128xf32, #tpu.memory_space<vmem>>, vector<1x32x128xf32>,
    return
  }
  func.func @transform_0(%arg0: i32, %arg1: i32) -> (i32, i32, i32) {
    %c0_i32 = arith.constant 0 : i32
    %c0_i32_0 = arith.constant 0 : i32
    return %arg0, %c0_i32, %arg1 : i32, i32, i32
  }
  func.func @transform_1(%arg0: i32, %arg1: i32) -> (i32, i32) {
    %c0_i32 = arith.constant 0 : i32
    %c0_i32_0 = arith.constant 0 : i32
    %c0_i32_1 = arith.constant 0 : i32
    return %c0_i32, %c0_i32_0 : i32, i32
  }
  func.func @transform_2(%arg0: i32, %arg1: i32) -> (i32, i32) {
    %c0_i32 = arith.constant 0 : i32
    %c0_i32_0 = arith.constant 0 : i32
    %c0_i32_1 = arith.constant 0 : i32
    return %c0_i32, %c0_i32_0 : i32, i32
  }
  func.func @transform_3(%arg0: i32, %arg1: i32) -> (i32, i32) {
    %c0_i32 = arith.constant 0 : i32
    %c0_i32_0 = arith.constant 0 : i32
    %c0_i32_1 = arith.constant 0 : i32
    return %c0_i32, %c0_i32_0 : i32, i32
  }
  func.func @transform_4(%arg0: i32, %arg1: i32) -> (i32, i32) {
    %c0_i32 = arith.constant 0 : i32
    %c0_i32_0 = arith.constant 0 : i32
    %c0_i32_1 = arith.constant 0 : i32
    return %c0_i32, %c0_i32_0 : i32, i32
  }
  func.func @transform_5(%arg0: i32, %arg1: i32) -> (i32, i32) {
    %c0_i32 = arith.constant 0 : i32
    %c0_i32_0 = arith.constant 0 : i32
    %c0_i32_1 = arith.constant 0 : i32
    return %c0_i32, %c0_i32_0 : i32, i32
  }
  func.func @transform_6(%arg0: i32, %arg1: i32) -> (i32, i32) {
    %c0_i32 = arith.constant 0 : i32
    %c0_i32_0 = arith.constant 0 : i32
    %c0_i32_1 = arith.constant 0 : i32
    return %c0_i32, %c0_i32_0 : i32, i32
  }
  func.func @transform_7(%arg0: i32, %arg1: i32) -> (i32, i32) {
    %c0_i32 = arith.constant 0 : i32
    %c0_i32_0 = arith.constant 0 : i32
    %c0_i32_1 = arith.constant 0 : i32
    return %c0_i32, %c0_i32_0 : i32, i32
  }
  func.func @transform_8(%arg0: i32, %arg1: i32) -> (i32, i32, i32) {
    %c0_i32 = arith.constant 0 : i32
    %c0_i32_0 = arith.constant 0 : i32
    return %arg0, %c0_i32, %arg1 : i32, i32, i32
  }
  func.func @transform_9(%arg0: i32, %arg1: i32) -> (i32, i32, i32) {
    %c0_i32 = arith.constant 0 : i32
    %c0_i32_0 = arith.constant 0 : i32
    return %arg0, %c0_i32, %arg1 : i32, i32, i32
  }
  func.func @transform_10(%arg0: i32, %arg1: i32) -> (i32, i32, i32) {
    %c0_i32 = arith.constant 0 : i32
    %c0_i32_0 = arith.constant 0 : i32
    return %arg0, %c0_i32, %arg1 : i32, i32, i32
  }
}

</mosaic_0001>

<llo_original>
// kernel: tpu_custom_call.1
$region0: #{tpu_custom_call.1}
  #allocation0 [shape = 'u32[]', space=smem, size = 0x4, offset = 0x4, fixed_abs, tag = 'smem constant byte address 0x4 - core index']
  #allocation1 [shape = 'u32[72,128]{1,0:T(1,128)}', space=vmem, size = 0x9000, scoped, tag = 'internal scratch']
  %s0 = inlined_call_operand.vmem [shape: f32[2,32,128], index: 0, kind: input, shape index: {}]
  %s1 = inlined_call_operand.vmem [shape: f32[8,32], index: 1, kind: input, shape index: {}]
  %s2 = inlined_call_operand.vmem [shape: f32[8,1], index: 2, kind: input, shape index: {}]
  %s3 = inlined_call_operand.vmem [shape: f32[64,32], index: 3, kind: input, shape index: {}]
  %s4 = inlined_call_operand.vmem [shape: f32[64,1], index: 4, kind: input, shape index: {}]
  %s5 = inlined_call_operand.vmem [shape: f32[8,64], index: 5, kind: input, shape index: {}]
  %s6 = inlined_call_operand.vmem [shape: f32[32,8], index: 6, kind: input, shape index: {}]
  %s7 = inlined_call_operand.vmem [shape: f32[32,1], index: 7, kind: input, shape index: {}]
  %s8 = inlined_call_operand.hbm [shape: f32[2,32,128], index: 8, kind: output, shape index: {0}]
  %s9 = inlined_call_operand.hbm [shape: f32[2,1,128], index: 9, kind: output, shape index: {1}]
  %s10 = inlined_call_operand.hbm [shape: s32[2,1,128], index: 10, kind: output, shape index: {2}]
  %11 = xla_tuple %s8, %s9, %s10
  %s12 = sld [smem:[#allocation0]]
  $region81: #{tpu_custom_call.1} parent=0
    _
  %s14 = ssub.s32 1, %s12
  %s15 = scalar_select 0, %s14, %s12
  $region1: #{tpu_custom_call.1} parent=0
    #allocation2 [shape = 'u8[32768]{0}', space=vmem, size = 0x8000, scoped, tag = 'output window, operand 0']
    #allocation3 [shape = 's32[2]{0}', space=sflag, size = 0x8, scoped, tag = 'scoped memory for tpu_custom_call.1']
    #allocation4 [shape = 'u8[1024]{0}', space=vmem, size = 0x400, scoped, tag = 'output window, operand 1']
    #allocation5 [shape = 's32[2]{0}', space=sflag, size = 0x8, scoped, tag = 'scoped memory for tpu_custom_call.1']
    #allocation6 [shape = 'u8[1024]{0}', space=vmem, size = 0x400, scoped, tag = 'output window, operand 2']
    %16 = vsyncpa [#allocation3], 0
    %s17 = scalar_lea.sflag [#allocation3], 1
    %18 = vsyncpa %s17, 0
    %19 = vsyncpa [#allocation5], 0
    %s20 = scalar_lea.sflag [#allocation5], 1
    %21 = vsyncpa %s20, 0
    loop: start=0, step=1, limit=4
    $region2: #{tpu_custom_call.1} parent=1 // loop_pre_header
      _
    $region3: #{tpu_custom_call.1} parent=1 // loop_header
      %s23 = sphi 0, %s27
      %p24 = scmp.ge.s32.totalorder %s23, 4
      %s30 = sphi 0, %s42
      %s31 = sphi 0, %s38
      %s32 = sphi 0, %s30
      %s33 = sphi 0, %s31
      %s34 = sphi 0, %s32
      %s35 = sphi 0, %s33
      %s47 = sphi 0, %s49
      %s50 = sphi 0, %s47
      %s51 = sphi 0, %s50
      %s67 = sphi 0, %s51
      %s71 = sphi 0, %s71
      %s73 = sphi 0, %s71
      %s74 = sphi 0, %s73
      %s88 = sphi 0, %s74
      %s92 = sphi 0, %s92
      %s94 = sphi 0, %s92
      %s95 = sphi 0, %s94
      %s109 = sphi 0, %s95
      %s113 = sphi 0, %s113
      %s115 = sphi 0, %s113
      %s116 = sphi 0, %s115
      %s130 = sphi 0, %s116
      %s134 = sphi 0, %s134
      %s136 = sphi 0, %s134
      %s137 = sphi 0, %s136
      %s151 = sphi 0, %s137
      %s155 = sphi 0, %s155
      %s157 = sphi 0, %s155
      %s158 = sphi 0, %s157
      %s172 = sphi 0, %s158
      %s176 = sphi 0, %s176
      %s178 = sphi 0, %s176
      %s179 = sphi 0, %s178
      %s193 = sphi 0, %s179
      %s197 = sphi 0, %s197
      %s199 = sphi 0, %s197
      %s200 = sphi 0, %s199
      %s214 = sphi 0, %s200
      %s222 = sphi 0, %s224
      %s225 = sphi 0, %s222
      %s226 = sphi 0, %s225
      %s242 = sphi 0, %s226
      %s250 = sphi 0, %s252
      %s253 = sphi 0, %s250
      %s254 = sphi 0, %s253
      %s270 = sphi 0, %s254
      %s278 = sphi 0, %s280
      %s281 = sphi 0, %s278
      %s282 = sphi 0, %s281
      %s298 = sphi 0, %s282
    $region4: #{tpu_custom_call.1} parent=1 // loop_header_branch
      %26 = sbr.rel (%p24) target = $region8
    $region5: #{tpu_custom_call.1} parent=1 // loop_body
      %s28 = ssub.s32 %s23, 1
      %s29 = ssub.s32 %s23, 2
      %s36 = sadd.s32 1, %s31
      %p37 = scmp.ge.s32.totalorder %s36, 1
      %s38 = scalar_select %p37, 0, %s36
      %s39 = sadd.s32 1, %s30
      %s40 = scalar_select %p37, %s39, %s30
      %p41 = scmp.ge.s32.totalorder %s40, 2
      %s42 = scalar_select %p41, 0, %s40
      %s43 = ssub.s32 %s30, %s42
      %s44 = ssub.s32 %s31, %s38
      %s45 = sor.u32 %s43, %s44
      %p46 = scmp.eq.s32.totalorder %s45, 0
      %s48 = sadd.s32 %s47, 1
      %s49 = scalar_select %p46, %s47, %s48
      %p52 = pneg %p46
      %p53 = scmp.eq.s32.totalorder %s23, 1
      %p54 = por %p52, %p53
      %p55 = scmp.ne.s32.totalorder %s47, %s50
      %p56 = scmp.eq.s32.totalorder %s23, 0
      %p57 = por %p55, %p56
      %p58 = scmp.ne.s32.totalorder %s47, %s50
      %p59 = scmp.eq.s32.totalorder %s28, 1
      %p60 = por %p58, %p59
      %p61 = scmp.ne.s32.totalorder %s50, %s51
      %p62 = scmp.eq.s32.totalorder %s28, 0
      %p63 = por %p61, %p62
      %p64 = scmp.ne.s32.totalorder %s50, %s51
      %p65 = scmp.eq.s32.totalorder %s29, 1
      %p66 = por %p64, %p65
      %p68 = scmp.ne.s32.totalorder %s51, %s67
      %p69 = scmp.eq.s32.totalorder %s29, 0
      %p70 = por %p68, %p69
      %s72 = sadd.s32 %s71, 1
      %p75 = scmp.eq.s32.totalorder %s23, 1
      %p76 = scmp.ne.s32.totalorder %s71, %s73
      %p77 = scmp.eq.s32.totalorder %s23, 0
      %p78 = por %p76, %p77
      %p79 = scmp.ne.s32.totalorder %s71, %s73
      %p80 = scmp.eq.s32.totalorder %s28, 1
      %p81 = por %p79, %p80
      %p82 = scmp.ne.s32.totalorder %s73, %s74
      %p83 = scmp.eq.s32.totalorder %s28, 0
      %p84 = por %p82, %p83
      %p85 = scmp.ne.s32.totalorder %s73, %s74
      %p86 = scmp.eq.s32.totalorder %s29, 1
      %p87 = por %p85, %p86
      %p89 = scmp.ne.s32.totalorder %s74, %s88
      %p90 = scmp.eq.s32.totalorder %s29, 0
      %p91 = por %p89, %p90
      %s93 = sadd.s32 %s92, 1
      %p96 = scmp.eq.s32.totalorder %s23, 1
      %p97 = scmp.ne.s32.totalorder %s92, %s94
      %p98 = scmp.eq.s32.totalorder %s23, 0
      %p99 = por %p97, %p98
      %p100 = scmp.ne.s32.totalorder %s92, %s94
      %p101 = scmp.eq.s32.totalorder %s28, 1
      %p102 = por %p100, %p101
      %p103 = scmp.ne.s32.totalorder %s94, %s95
      %p104 = scmp.eq.s32.totalorder %s28, 0
      %p105 = por %p103, %p104
      %p106 = scmp.ne.s32.totalorder %s94, %s95
      %p107 = scmp.eq.s32.totalorder %s29, 1
      %p108 = por %p106, %p107
      %p110 = scmp.ne.s32.totalorder %s95, %s109
      %p111 = scmp.eq.s32.totalorder %s29, 0
      %p112 = por %p110, %p111
      %s114 = sadd.s32 %s113, 1
      %p117 = scmp.eq.s32.totalorder %s23, 1
      %p118 = scmp.ne.s32.totalorder %s113, %s115
      %p119 = scmp.eq.s32.totalorder %s23, 0
      %p120 = por %p118, %p119
      %p121 = scmp.ne.s32.totalorder %s113, %s115
      %p122 = scmp.eq.s32.totalorder %s28, 1
      %p123 = por %p121, %p122
      %p124 = scmp.ne.s32.totalorder %s115, %s116
      %p125 = scmp.eq.s32.totalorder %s28, 0
      %p126 = por %p124, %p125
      %p127 = scmp.ne.s32.totalorder %s115, %s116
      %p128 = scmp.eq.s32.totalorder %s29, 1
      %p129 = por %p127, %p128
      %p131 = scmp.ne.s32.totalorder %s116, %s130
      %p132 = scmp.eq.s32.totalorder %s29, 0
      %p133 = por %p131, %p132
      %s135 = sadd.s32 %s134, 1
      %p138 = scmp.eq.s32.totalorder %s23, 1
      %p139 = scmp.ne.s32.totalorder %s134, %s136
      %p140 = scmp.eq.s32.totalorder %s23, 0
      %p141 = por %p139, %p140
      %p142 = scmp.ne.s32.totalorder %s134, %s136
      %p143 = scmp.eq.s32.totalorder %s28, 1
      %p144 = por %p142, %p143
      %p145 = scmp.ne.s32.totalorder %s136, %s137
      %p146 = scmp.eq.s32.totalorder %s28, 0
      %p147 = por %p145, %p146
      %p148 = scmp.ne.s32.totalorder %s136, %s137
      %p149 = scmp.eq.s32.totalorder %s29, 1
      %p150 = por %p148, %p149
      %p152 = scmp.ne.s32.totalorder %s137, %s151
      %p153 = scmp.eq.s32.totalorder %s29, 0
      %p154 = por %p152, %p153
      %s156 = sadd.s32 %s155, 1
      %p159 = scmp.eq.s32.totalorder %s23, 1
      %p160 = scmp.ne.s32.totalorder %s155, %s157
      %p161 = scmp.eq.s32.totalorder %s23, 0
      %p162 = por %p160, %p161
      %p163 = scmp.ne.s32.totalorder %s155, %s157
      %p164 = scmp.eq.s32.totalorder %s28, 1
      %p165 = por %p163, %p164
      %p166 = scmp.ne.s32.totalorder %s157, %s158
      %p167 = scmp.eq.s32.totalorder %s28, 0
      %p168 = por %p166, %p167
      %p169 = scmp.ne.s32.totalorder %s157, %s158
      %p170 = scmp.eq.s32.totalorder %s29, 1
      %p171 = por %p169, %p170
      %p173 = scmp.ne.s32.totalorder %s158, %s172
      %p174 = scmp.eq.s32.totalorder %s29, 0
      %p175 = por %p173, %p174
      %s177 = sadd.s32 %s176, 1
      %p180 = scmp.eq.s32.totalorder %s23, 1
      %p181 = scmp.ne.s32.totalorder %s176, %s178
      %p182 = scmp.eq.s32.totalorder %s23, 0
      %p183 = por %p181, %p182
      %p184 = scmp.ne.s32.totalorder %s176, %s178
      %p185 = scmp.eq.s32.totalorder %s28, 1
      %p186 = por %p184, %p185
      %p187 = scmp.ne.s32.totalorder %s178, %s179
      %p188 = scmp.eq.s32.totalorder %s28, 0
      %p189 = por %p187, %p188
      %p190 = scmp.ne.s32.totalorder %s178, %s179
      %p191 = scmp.eq.s32.totalorder %s29, 1
      %p192 = por %p190, %p191
      %p194 = scmp.ne.s32.totalorder %s179, %s193
      %p195 = scmp.eq.s32.totalorder %s29, 0
      %p196 = por %p194, %p195
      %s198 = sadd.s32 %s197, 1
      %p201 = scmp.eq.s32.totalorder %s23, 1
      %p202 = scmp.ne.s32.totalorder %s197, %s199
      %p203 = scmp.eq.s32.totalorder %s23, 0
      %p204 = por %p202, %p203
      %p205 = scmp.ne.s32.totalorder %s197, %s199
      %p206 = scmp.eq.s32.totalorder %s28, 1
      %p207 = por %p205, %p206
      %p208 = scmp.ne.s32.totalorder %s199, %s200
      %p209 = scmp.eq.s32.totalorder %s28, 0
      %p210 = por %p208, %p209
      %p211 = scmp.ne.s32.totalorder %s199, %s200
      %p212 = scmp.eq.s32.totalorder %s29, 1
      %p213 = por %p211, %p212
      %p215 = scmp.ne.s32.totalorder %s200, %s214
      %p216 = scmp.eq.s32.totalorder %s29, 0
      %p217 = por %p215, %p216
      %s218 = ssub.s32 %s30, %s42
      %s219 = ssub.s32 %s31, %s38
      %s220 = sor.u32 %s218, %s219
      %p221 = scmp.eq.s32.totalorder %s220, 0
      %s223 = sadd.s32 %s222, 1
      %s224 = scalar_select %p221, %s222, %s223
      %p227 = pneg %p221
      %p228 = scmp.eq.s32.totalorder %s23, 1
      %p229 = por %p227, %p228
      %p230 = scmp.ne.s32.totalorder %s222, %s225
      %p231 = scmp.eq.s32.totalorder %s23, 0
      %p232 = por %p230, %p231
      %p233 = scmp.ne.s32.totalorder %s222, %s225
      %p234 = scmp.eq.s32.totalorder %s28, 1
      %p235 = por %p233, %p234
      %p236 = scmp.ne.s32.totalorder %s225, %s226
      %p237 = scmp.eq.s32.totalorder %s28, 0
      %p238 = por %p236, %p237
      %p239 = scmp.ne.s32.totalorder %s225, %s226
      %p240 = scmp.eq.s32.totalorder %s29, 1
      %p241 = por %p239, %p240
      %p243 = scmp.ne.s32.totalorder %s226, %s242
      %p244 = scmp.eq.s32.totalorder %s29, 0
      %p245 = por %p243, %p244
      %s246 = ssub.s32 %s30, %s42
      %s247 = ssub.s32 %s31, %s38
      %s248 = sor.u32 %s246, %s247
      %p249 = scmp.eq.s32.totalorder %s248, 0
      %s251 = sadd.s32 %s250, 1
      %s252 = scalar_select %p249, %s250, %s251
      %p255 = pneg %p249
      %p256 = scmp.eq.s32.totalorder %s23, 1
      %p257 = por %p255, %p256
      %p258 = scmp.ne.s32.totalorder %s250, %s253
      %p259 = scmp.eq.s32.totalorder %s23, 0
      %p260 = por %p258, %p259
      %p261 = scmp.ne.s32.totalorder %s250, %s253
      %p262 = scmp.eq.s32.totalorder %s28, 1
      %p263 = por %p261, %p262
      %p264 = scmp.ne.s32.totalorder %s253, %s254
      %p265 = scmp.eq.s32.totalorder %s28, 0
      %p266 = por %p264, %p265
      %p267 = scmp.ne.s32.totalorder %s253, %s254
      %p268 = scmp.eq.s32.totalorder %s29, 1
      %p269 = por %p267, %p268
      %p271 = scmp.ne.s32.totalorder %s254, %s270
      %p272 = scmp.eq.s32.totalorder %s29, 0
      %p273 = por %p271, %p272
      %s274 = ssub.s32 %s30, %s42
      %s275 = ssub.s32 %s31, %s38
      %s276 = sor.u32 %s274, %s275
      %p277 = scmp.eq.s32.totalorder %s276, 0
      %s279 = sadd.s32 %s278, 1
      %s280 = scalar_select %p277, %s278, %s279
      %p283 = pneg %p277
      %p284 = scmp.eq.s32.totalorder %s23, 1
      %p285 = por %p283, %p284
      %p286 = scmp.ne.s32.totalorder %s278, %s281
      %p287 = scmp.eq.s32.totalorder %s23, 0
      %p288 = por %p286, %p287
      %p289 = scmp.ne.s32.totalorder %s278, %s281
      %p290 = scmp.eq.s32.totalorder %s28, 1
      %p291 = por %p289, %p290
      %p292 = scmp.ne.s32.totalorder %s281, %s282
      %p293 = scmp.eq.s32.totalorder %s28, 0
      %p294 = por %p292, %p293
      %p295 = scmp.ne.s32.totalorder %s281, %s282
      %p296 = scmp.eq.s32.totalorder %s29, 1
      %p297 = por %p295, %p296
      %p299 = scmp.ne.s32.totalorder %s282, %s298
      %p300 = scmp.eq.s32.totalorder %s29, 0
      %p301 = por %p299, %p300
      %p302 = scmp.le.s32.totalorder 1, %s23
      %p303 = scmp.lt.s32.totalorder %s23, 3
      %p304 = pnand %p302, %p303
      %p305 = pneg %p304
      // Predicated region
      $region9: #{tpu_custom_call.1} parent=5 // pred_check
        _
      $region10: #{tpu_custom_call.1} parent=5 // pred_check_branch
        %307 = sbr.rel (%p304) target = $region12
      $region11: #{tpu_custom_call.1} parent=5 // pred_region
        %s308 = ssub.s32 %s23, 1
        // Predicated region
        $region13: #{tpu_custom_call.1} parent=11 // pred_check
          %p309 = pneg %p84
        $region14: #{tpu_custom_call.1} parent=11 // pred_check_branch
          %311 = sbr.rel (%p309) target = $region16
        $region15: #{tpu_custom_call.1} parent=11 // pred_region
          _
        $region16: #{tpu_custom_call.1} parent=11 // pred_fallthru
          _
        // Predicated region
        $region17: #{tpu_custom_call.1} parent=11 // pred_check
          %p312 = pneg %p105
        $region18: #{tpu_custom_call.1} parent=11 // pred_check_branch
          %314 = sbr.rel (%p312) target = $region20
        $region19: #{tpu_custom_call.1} parent=11 // pred_region
          _
        $region20: #{tpu_custom_call.1} parent=11 // pred_fallthru
          _
        // Predicated region
        $region21: #{tpu_custom_call.1} parent=11 // pred_check
          %p315 = pneg %p126
        $region22: #{tpu_custom_call.1} parent=11 // pred_check_branch
          %317 = sbr.rel (%p315) target = $region24
        $region23: #{tpu_custom_call.1} parent=11 // pred_region
          _
        $region24: #{tpu_custom_call.1} parent=11 // pred_fallthru
          _
        // Predicated region
        $region25: #{tpu_custom_call.1} parent=11 // pred_check
          %p318 = pneg %p147
        $region26: #{tpu_custom_call.1} parent=11 // pred_check_branch
          %320 = sbr.rel (%p318) target = $region28
        $region27: #{tpu_custom_call.1} parent=11 // pred_region
          _
        $region28: #{tpu_custom_call.1} parent=11 // pred_fallthru
          _
        // Predicated region
        $region29: #{tpu_custom_call.1} parent=11 // pred_check
          %p321 = pneg %p168
        $region30: #{tpu_custom_call.1} parent=11 // pred_check_branch
          %323 = sbr.rel (%p321) target = $region32
        $region31: #{tpu_custom_call.1} parent=11 // pred_region
          _
        $region32: #{tpu_custom_call.1} parent=11 // pred_fallthru
          _
        // Predicated region
        $region33: #{tpu_custom_call.1} parent=11 // pred_check
          %p324 = pneg %p189
        $region34: #{tpu_custom_call.1} parent=11 // pred_check_branch
          %326 = sbr.rel (%p324) target = $region36
        $region35: #{tpu_custom_call.1} parent=11 // pred_region
          _
        $region36: #{tpu_custom_call.1} parent=11 // pred_fallthru
          _
        // Predicated region
        $region37: #{tpu_custom_call.1} parent=11 // pred_check
          %p327 = pneg %p210
        $region38: #{tpu_custom_call.1} parent=11 // pred_check_branch
          %329 = sbr.rel (%p327) target = $region40
        $region39: #{tpu_custom_call.1} parent=11 // pred_region
          _
        $region40: #{tpu_custom_call.1} parent=11 // pred_fallthru
          _
      $region12: #{tpu_custom_call.1} parent=5 // pred_fallthru
        _
      %p330 = scmp.lt.s32.totalorder %s23, 2
      // Predicated region
      $region41: #{tpu_custom_call.1} parent=5 // pred_check
        %p331 = pneg %p330
      $region42: #{tpu_custom_call.1} parent=5 // pred_check_branch
        %333 = sbr.rel (%p331) target = $region44
      $region43: #{tpu_custom_call.1} parent=5 // pred_region
        // Predicated region
        $region45: #{tpu_custom_call.1} parent=43 // pred_check
          %p334 = pneg %p57
        $region46: #{tpu_custom_call.1} parent=43 // pred_check_branch
          %336 = sbr.rel (%p334) target = $region48
        $region47: #{tpu_custom_call.1} parent=43 // pred_region
          %p337 = scmp.lt.s32.totalorder %s30, 1
          %s338 = scalar_select %p337, %s30, 1
          %p339 = scmp.lt.s32.totalorder %s31, 0
          %s340 = scalar_select %p339, %s31, 0
          %s341 = smul.addr %s338, 4
          %s342 = sadd.s32 %s340, %s341
          %s343 = smul.addr %s342, 8
          %s344 = scalar_lea.vmem %s0, %s343
        $region48: #{tpu_custom_call.1} parent=43 // pred_fallthru
          _
      $region44: #{tpu_custom_call.1} parent=5 // pred_fallthru
        _
      %p345 = scmp.le.s32.totalorder 1, %s23
      %p346 = scmp.lt.s32.totalorder %s23, 3
      %p347 = pnand %p345, %p346
      %p348 = pneg %p347
      // Predicated region
      $region49: #{tpu_custom_call.1} parent=5 // pred_check
        _
      $region50: #{tpu_custom_call.1} parent=5 // pred_check_branch
        %350 = sbr.rel (%p347) target = $region52
      $region51: #{tpu_custom_call.1} parent=5 // pred_region
        %s351 = ssub.s32 %s23, 1
        %p352 = scmp.lt.s32.totalorder %s32, 1
        %s353 = scalar_select %p352, %s32, 1
        %p354 = scmp.lt.s32.totalorder %s33, 0
        %s355 = scalar_select %p354, %s33, 0
        %s356 = smul.addr %s353, 4
        %s357 = sadd.s32 %s355, %s356
        %s358 = smul.addr %s357, 8
        %s359 = scalar_lea.vmem %s0, %s358
        %p360 = pneg %p63
        %p361 = pneg %p60
        %p362 = pneg %p84
        %p363 = pneg %p81
        %p364 = pneg %p105
        %p365 = pneg %p102
        %p366 = pneg %p126
        %p367 = pneg %p123
        %p368 = pneg %p147
        %p369 = pneg %p144
        %p370 = pneg %p168
        %p371 = pneg %p165
        %p372 = pneg %p189
        %p373 = pneg %p186
        %p374 = pneg %p210
        %p375 = pneg %p207
        %p376 = pneg %p238
        %p377 = pneg %p235
        %s378 = sand.u32 %s225, 1
        %s379 = scalar_lea.sflag [#allocation3], %s378
        %s380 = sand.u32 %s225, 1
        %s381 = smul.addr %s380, 32
        %s382 = scalar_lea.vmem [#allocation2], %s381
        %p383 = pneg %p266
        %p384 = pneg %p263
        %s385 = sand.u32 %s28, 1
        %s386 = scalar_lea.sflag [#allocation5], %s385
        %s387 = sand.u32 %s253, 1
        %s388 = scalar_lea.vmem [#allocation4], %s387
        %p389 = pneg %p294
        %p390 = pneg %p291
        %s391 = sand.u32 %s28, 1
        %s392 = scalar_lea.sflag [#allocation5], %s391
        %s393 = sand.u32 %s281, 1
        %s394 = scalar_lea.vmem [#allocation6], %s393
        %p395 = scmp.lt.s32.totalorder %s32, 1
        %s396 = scalar_select %p395, %s32, 1
        %p397 = scmp.lt.s32.totalorder %s33, 0
        %s398 = scalar_select %p397, %s33, 0
        %s399 = smul.addr %s396, 4
        %s400 = sadd.s32 %s398, %s399
        %s401 = smul.addr %s400, 8
        %s402 = scalar_lea.vmem %s0, %s401
        %v403 = vld [vmem:[%s402] sm:$0xff]
        %v404 = vld [vmem:[%s402 + $0x8] sm:$0xff]
        %v405 = vld [vmem:[%s402 + $0x10] sm:$0xff]
        %v406 = vld [vmem:[%s402 + $0x18] sm:$0xff]
        %v407 = vld [vmem:[%s3] sm:$0xff]
        %v408 = vld [vmem:[%s3 + $0x8] sm:$0xff]
        %v409 = vld [vmem:[%s3 + $0x10] sm:$0xff]
        %v410 = vld [vmem:[%s3 + $0x18] sm:$0xff]
        %v411 = vld [vmem:[%s3 + $0x20] sm:$0xff]
        %v412 = vld [vmem:[%s3 + $0x28] sm:$0xff]
        %v413 = vld [vmem:[%s3 + $0x30] sm:$0xff]
        %v414 = vld [vmem:[%s3 + $0x38] sm:$0xff]
        %v415 = vld [vmem:[%s4] sm:$0xff]
        %v416 = vld [vmem:[%s4 + $0x8] sm:$0xff]
        %v417 = vld [vmem:[%s4 + $0x10] sm:$0xff]
        %v418 = vld [vmem:[%s4 + $0x18] sm:$0xff]
        %v419 = vld [vmem:[%s4 + $0x20] sm:$0xff]
        %v420 = vld [vmem:[%s4 + $0x28] sm:$0xff]
        %v421 = vld [vmem:[%s4 + $0x30] sm:$0xff]
        %v422 = vld [vmem:[%s4 + $0x38] sm:$0xff]
        %424 = vset.pattern.permute.xlu0 0
        %425 = vperm.xlu0 %424, %v415
        %v426 = vpop.permute.xlu0 %425
        %429 = vset.pattern.permute.xlu0 0
        %430 = vperm.xlu0 %429, %v416
        %v431 = vpop.permute.xlu0 %430
        %434 = vset.pattern.permute.xlu0 0
        %435 = vperm.xlu0 %434, %v417
        %v436 = vpop.permute.xlu0 %435
        %439 = vset.pattern.permute.xlu0 0
        %440 = vperm.xlu0 %439, %v418
        %v441 = vpop.permute.xlu0 %440
        %444 = vset.pattern.permute.xlu0 0
        %445 = vperm.xlu0 %444, %v419
        %v446 = vpop.permute.xlu0 %445
        %449 = vset.pattern.permute.xlu0 0
        %450 = vperm.xlu0 %449, %v420
        %v451 = vpop.permute.xlu0 %450
        %454 = vset.pattern.permute.xlu0 0
        %455 = vperm.xlu0 %454, %v421
        %v456 = vpop.permute.xlu0 %455
        %459 = vset.pattern.permute.xlu0 0
        %460 = vperm.xlu0 %459, %v422
        %v461 = vpop.permute.xlu0 %460
        %vm463 = vcmask 261120
        %v465 = vsel %vm463, %v407, 0
        %v468 = vsel %vm463, %v408, 0
        %v471 = vsel %vm463, %v409, 0
        %v474 = vsel %vm463, %v410, 0
        %v477 = vsel %vm463, %v411, 0
        %v480 = vsel %vm463, %v412, 0
        %v483 = vsel %vm463, %v413, 0
        %v486 = vsel %vm463, %v414, 0
        %488 = vmatpush.msra.mxu0 0.0
        %489 = vmatpush.msra.mxu0 0.0
        %490 = vmatpush.msra.mxu0 0.0
        %491 = vmatpush.msra.mxu0 0.0
        %492 = vmatpush.msra.mxu0 0.0
        %493 = vmatpush.msra.mxu0 0.0
        %494 = vmatpush.msra.mxu0 0.0
        %495 = vmatpush.msra.mxu0 0.0
        %496 = vmatpush.msra.mxu0 0.0
        %497 = vmatpush.msra.mxu0 0.0
        %498 = vmatpush.msra.mxu0 0.0
        %499 = vmatpush.msra.mxu0 0.0
        %500 = vmatpush.msra.mxu0 %v406
        %501 = vmatpush.msra.mxu0 %v405
        %502 = vmatpush.msra.mxu0 %v404
        %503 = vmatpush.msra.mxu0 %v403
        %504 = vmatmul.f32.gmra.mxu0 %v465
        %v505 = vpop.f32.mrf.mxu0
        %v506 = vadd.f32 %v426, %v505
        %507 = vmatmul.f32.gmra.mxu0 %v468
        %v508 = vpop.f32.mrf.mxu0
        %v509 = vadd.f32 %v431, %v508
        %510 = vmatmul.f32.gmra.mxu0 %v471
        %v511 = vpop.f32.mrf.mxu0
        %v512 = vadd.f32 %v436, %v511
        %513 = vmatmul.f32.gmra.mxu0 %v474
        %v514 = vpop.f32.mrf.mxu0
        %v515 = vadd.f32 %v441, %v514
        %516 = vmatmul.f32.gmra.mxu0 %v477
        %v517 = vpop.f32.mrf.mxu0
        %v518 = vadd.f32 %v446, %v517
        %519 = vmatmul.f32.gmra.mxu0 %v480
        %v520 = vpop.f32.mrf.mxu0
        %v521 = vadd.f32 %v451, %v520
        %522 = vmatmul.f32.gmra.mxu0 %v483
        %v523 = vpop.f32.mrf.mxu0
        %v524 = vadd.f32 %v456, %v523
        %525 = vmatmul.f32.gmra.mxu0 %v486
        %v526 = vpop.f32.mrf.mxu0
        %v527 = vadd.f32 %v461, %v526
        %528 = vdwg.mxu0
        %v529 = vmax.f32 %v506, %v518
        %v530 = vmax.f32 %v509, %v521
        %v531 = vmax.f32 %v512, %v524
        %v532 = vmax.f32 %v515, %v527
        %v533 = vmax.f32 %v529, %v530
        %v534 = vmax.f32 %v531, %v532
        %v535 = vmax.f32 %v533, %v534
        %v536 = vrot.slane %v535, 4
        %v537 = vmax.f32 %v535, %v536
        %v538 = vrot.slane %v537, 2
        %v539 = vmax.f32 %v537, %v538
        %v540 = vrot.slane %v539, 1
        %v541 = vmax.f32 %v539, %v540
        %v542 = vlaneseq
        %v543 = vshrl.u32 %v542, 7
        %v544 = vadd.s32 %v543, 8
        %v545 = vadd.s32 %v543, 16
        %v546 = vadd.s32 %v543, 24
        %v547 = vadd.s32 %v543, 32
        %v548 = vadd.s32 %v543, 40
        %v549 = vadd.s32 %v543, 48
        %v550 = vadd.s32 %v543, 56
        %vm551 = vcmp.eq.f32.partialorder %v506, %v541
        %vm552 = vcmp.eq.f32.partialorder %v509, %v541
        %vm553 = vcmp.eq.f32.partialorder %v512, %v541
        %vm554 = vcmp.eq.f32.partialorder %v515, %v541
        %vm555 = vcmp.eq.f32.partialorder %v518, %v541
        %vm556 = vcmp.eq.f32.partialorder %v521, %v541
        %vm557 = vcmp.eq.f32.partialorder %v524, %v541
        %vm558 = vcmp.eq.f32.partialorder %v527, %v541
        %v559 = vsel %vm551, %v543, 64
        %v560 = vsel %vm552, %v544, 64
        %v561 = vsel %vm553, %v545, 64
        %v562 = vsel %vm554, %v546, 64
        %v563 = vsel %vm555, %v547, 64
        %v564 = vsel %vm556, %v548, 64
        %v565 = vsel %vm557, %v549, 64
        %v566 = vsel %vm558, %v550, 64
        %vm567 = vcmp.lt.s32.totalorder %v559, %v563
        %v568 = vsel %vm567, %v559, %v563
        %vm569 = vcmp.lt.s32.totalorder %v560, %v564
        %v570 = vsel %vm569, %v560, %v564
        %vm571 = vcmp.lt.s32.totalorder %v561, %v565
        %v572 = vsel %vm571, %v561, %v565
        %vm573 = vcmp.lt.s32.totalorder %v562, %v566
        %v574 = vsel %vm573, %v562, %v566
        %vm575 = vcmp.lt.s32.totalorder %v568, %v570
        %v576 = vsel %vm575, %v568, %v570
        %vm577 = vcmp.lt.s32.totalorder %v572, %v574
        %v578 = vsel %vm577, %v572, %v574
        %vm579 = vcmp.lt.s32.totalorder %v576, %v578
        %v580 = vsel %vm579, %v576, %v578
        %v581 = vrot.slane %v580, 4
        %vm582 = vcmp.lt.s32.totalorder %v580, %v581
        %v583 = vsel %vm582, %v580, %v581
        %v584 = vrot.slane %v583, 2
        %vm585 = vcmp.lt.s32.totalorder %v583, %v584
        %v586 = vsel %vm585, %v583, %v584
        %v587 = vrot.slane %v586, 1
        %vm588 = vcmp.lt.s32.totalorder %v586, %v587
        %v589 = vsel %vm588, %v586, %v587
        %vm590 = vcmp.eq.s32.totalorder %v543, %v589
        %vm591 = vcmp.eq.s32.totalorder %v544, %v589
        %vm592 = vcmp.eq.s32.totalorder %v545, %v589
        %vm593 = vcmp.eq.s32.totalorder %v546, %v589
        %vm594 = vcmp.eq.s32.totalorder %v547, %v589
        %vm595 = vcmp.eq.s32.totalorder %v548, %v589
        %vm596 = vcmp.eq.s32.totalorder %v549, %v589
        %vm597 = vcmp.eq.s32.totalorder %v550, %v589
        %v598 = vsel %vm590, 1.0, 0.0
        %v599 = vsel %vm591, 1.0, 0.0
        %v600 = vsel %vm592, 1.0, 0.0
        %v601 = vsel %vm593, 1.0, 0.0
        %v602 = vsel %vm594, 1.0, 0.0
        %v603 = vsel %vm595, 1.0, 0.0
        %v604 = vsel %vm596, 1.0, 0.0
        %v605 = vsel %vm597, 1.0, 0.0
        %v606 = vld [vmem:[%s5] sm:$0xff]
        %vm607 = vcmask 523264
        %v609 = vsel %vm607, %v606, 0
        %611 = vmatpush.msra.mxu0 0.0
        %612 = vmatpush.msra.mxu0 0.0
        %613 = vmatpush.msra.mxu0 0.0
        %614 = vmatpush.msra.mxu0 0.0
        %615 = vmatpush.msra.mxu0 0.0
        %616 = vmatpush.msra.mxu0 0.0
        %617 = vmatpush.msra.mxu0 0.0
        %618 = vmatpush.msra.mxu0 0.0
        %619 = vmatpush.msra.mxu0 %v605
        %620 = vmatpush.msra.mxu0 %v604
        %621 = vmatpush.msra.mxu0 %v603
        %622 = vmatpush.msra.mxu0 %v602
        %623 = vmatpush.msra.mxu0 %v601
        %624 = vmatpush.msra.mxu0 %v600
        %625 = vmatpush.msra.mxu0 %v599
        %626 = vmatpush.msra.mxu0 %v598
        %627 = vmatmul.f32.gmra.mxu0 %v609
        %v628 = vpop.f32.mrf.mxu0
        %v629 = vadd.f32 0.0, %v628
        %630 = vdwg.mxu0
        %v631 = vld [vmem:[%s1] sm:$0xff]
        %v632 = vld [vmem:[%s2] sm:$0xff]
        %634 = vset.pattern.permute.xlu0 0
        %635 = vperm.xlu0 %634, %v632
        %v636 = vpop.permute.xlu0 %635
        %v639 = vsel %vm463, %v631, 0
        %641 = vmatpush.msra.mxu0 0.0
        %642 = vmatpush.msra.mxu0 0.0
        %643 = vmatpush.msra.mxu0 0.0
        %644 = vmatpush.msra.mxu0 0.0
        %645 = vmatpush.msra.mxu0 0.0
        %646 = vmatpush.msra.mxu0 0.0
        %647 = vmatpush.msra.mxu0 0.0
        %648 = vmatpush.msra.mxu0 0.0
        %649 = vmatpush.msra.mxu0 0.0
        %650 = vmatpush.msra.mxu0 0.0
        %651 = vmatpush.msra.mxu0 0.0
        %652 = vmatpush.msra.mxu0 0.0
        %653 = vmatpush.msra.mxu0 %v406
        %654 = vmatpush.msra.mxu0 %v405
        %655 = vmatpush.msra.mxu0 %v404
        %656 = vmatpush.msra.mxu0 %v403
        %657 = vmatmul.f32.gmra.mxu0 %v639
        %v658 = vpop.f32.mrf.mxu0
        %v659 = vadd.f32 %v636, %v658
        %660 = vdwg.mxu0
        %v661 = vsub.f32 %v659, %v629
        %v662 = vmul.f32 %v661, %v661
        %v663 = vrot.slane %v662, 4
        %v664 = vadd.f32 %v662, %v663
        %v665 = vrot.slane %v664, 2
        %v666 = vadd.f32 %v664, %v665
        %v667 = vrot.slane %v666, 1
        %v668 = vadd.f32 %v666, %v667
        %669 = vst [vmem:[%s388] sm:$0x1] %v668
        %670 = vst [vmem:[%s394] sm:$0x1] %v589
        %v671 = vld [vmem:[%s6] sm:$0xff]
        %v672 = vld [vmem:[%s6 + $0x8] sm:$0xff]
        %v673 = vld [vmem:[%s6 + $0x10] sm:$0xff]
        %v674 = vld [vmem:[%s6 + $0x18] sm:$0xff]
        %v675 = vld [vmem:[%s7] sm:$0xff]
        %v676 = vld [vmem:[%s7 + $0x8] sm:$0xff]
        %v677 = vld [vmem:[%s7 + $0x10] sm:$0xff]
        %v678 = vld [vmem:[%s7 + $0x18] sm:$0xff]
        %680 = vset.pattern.permute.xlu0 0
        %681 = vperm.xlu0 %680, %v675
        %v682 = vpop.permute.xlu0 %681
        %685 = vset.pattern.permute.xlu0 0
        %686 = vperm.xlu0 %685, %v676
        %v687 = vpop.permute.xlu0 %686
        %690 = vset.pattern.permute.xlu0 0
        %691 = vperm.xlu0 %690, %v677
        %v692 = vpop.permute.xlu0 %691
        %695 = vset.pattern.permute.xlu0 0
        %696 = vperm.xlu0 %695, %v678
        %v697 = vpop.permute.xlu0 %696
        %vm699 = vcmask 64512
        %v701 = vsel %vm699, %v671, 0
        %v704 = vsel %vm699, %v672, 0
        %v707 = vsel %vm699, %v673, 0
        %v710 = vsel %vm699, %v674, 0
        %712 = vmatpush.msra.mxu0 0.0
        %713 = vmatpush.msra.mxu0 0.0
        %714 = vmatpush.msra.mxu0 0.0
        %715 = vmatpush.msra.mxu0 0.0
        %716 = vmatpush.msra.mxu0 0.0
        %717 = vmatpush.msra.mxu0 0.0
        %718 = vmatpush.msra.mxu0 0.0
        %719 = vmatpush.msra.mxu0 0.0
        %720 = vmatpush.msra.mxu0 0.0
        %721 = vmatpush.msra.mxu0 0.0
        %722 = vmatpush.msra.mxu0 0.0
        %723 = vmatpush.msra.mxu0 0.0
        %724 = vmatpush.msra.mxu0 0.0
        %725 = vmatpush.msra.mxu0 0.0
        %726 = vmatpush.msra.mxu0 0.0
        %727 = vmatpush.msra.mxu0 %v629
        %728 = vmatmul.f32.gmra.mxu0 %v701
        %v729 = vpop.f32.mrf.mxu0
        %v730 = vadd.f32 %v682, %v729
        %731 = vmatmul.f32.gmra.mxu0 %v704
        %v732 = vpop.f32.mrf.mxu0
        %v733 = vadd.f32 %v687, %v732
        %734 = vmatmul.f32.gmra.mxu0 %v707
        %v735 = vpop.f32.mrf.mxu0
        %v736 = vadd.f32 %v692, %v735
        %737 = vmatmul.f32.gmra.mxu0 %v710
        %v738 = vpop.f32.mrf.mxu0
        %v739 = vadd.f32 %v697, %v738
        %740 = vdwg.mxu0
        %741 = vst [vmem:[%s382] sm:$0xff] %v730
        %742 = vst [vmem:[%s382 + $0x8] sm:$0xff] %v733
        %743 = vst [vmem:[%s382 + $0x10] sm:$0xff] %v736
        %744 = vst [vmem:[%s382 + $0x18] sm:$0xff] %v739
        %s745 = sand.u32 %s225, 1
        %s746 = scalar_lea.sflag [#allocation3], %s745
        %s747 = sand.u32 %s225, 1
        %s748 = smul.addr %s747, 32
        %s749 = scalar_lea.vmem [#allocation2], %s748
        %s750 = sand.u32 %s28, 1
        %s751 = scalar_lea.sflag [#allocation5], %s750
        %s752 = sand.u32 %s253, 1
        %s753 = scalar_lea.vmem [#allocation4], %s752
        %s754 = sand.u32 %s28, 1
        %s755 = scalar_lea.sflag [#allocation5], %s754
        %s756 = sand.u32 %s281, 1
        %s757 = scalar_lea.vmem [#allocation6], %s756
        // Predicated region
        $region53: #{tpu_custom_call.1} parent=51 // pred_check
          %p758 = pneg %p235
        $region54: #{tpu_custom_call.1} parent=51 // pred_check_branch
          %760 = sbr.rel (%p758) target = $region56
        $region55: #{tpu_custom_call.1} parent=51 // pred_region
          %762 = vsyncadd %s746, 0
          %s763 = smul.addr %s32, 4
          %s764 = sadd.s32 %s33, %s763
          %s765 = smul.addr %s764, 8
          %s766 = scalar_lea.hbm %s8, %s765
          %s767 = sshll.u32 %s749, 4
          %s768 = int_to_ptr.vmem [resolvable:$true] %s767
          %s769 = sshll.u32 %s766, 4
          %s770 = int_to_ptr.hbm [resolvable:$true] %s769
          %775 = dma.vmem_to_hbm [thread:$0]  %s768, 512, %s770, %s746, 128, 128, 8
        $region56: #{tpu_custom_call.1} parent=51 // pred_fallthru
          _
        // Predicated region
        $region57: #{tpu_custom_call.1} parent=51 // pred_check
          %p776 = pneg %p263
        $region58: #{tpu_custom_call.1} parent=51 // pred_check_branch
          %778 = sbr.rel (%p776) target = $region60
        $region59: #{tpu_custom_call.1} parent=51 // pred_region
          %780 = vsyncadd %s751, 0
          %s781 = sadd.s32 %s33, %s32
          %s782 = scalar_lea.hbm %s9, %s781
          %s784 = sshll.u32 %s753, 4
          %s785 = int_to_ptr.vmem [resolvable:$true] %s784
          %s786 = sshll.u32 %s782, 4
          %s787 = int_to_ptr.hbm [resolvable:$true] %s786
          %789 = dma.vmem_to_hbm [thread:$0]  %s785, 16, %s787, %s751
        $region60: #{tpu_custom_call.1} parent=51 // pred_fallthru
          _
        // Predicated region
        $region61: #{tpu_custom_call.1} parent=51 // pred_check
          %p790 = pneg %p291
        $region62: #{tpu_custom_call.1} parent=51 // pred_check_branch
          %792 = sbr.rel (%p790) target = $region64
        $region63: #{tpu_custom_call.1} parent=51 // pred_region
          %794 = vsyncadd %s755, 0
          %s795 = sadd.s32 %s33, %s32
          %s796 = scalar_lea.hbm %s10, %s795
          %s798 = sshll.u32 %s757, 4
          %s799 = int_to_ptr.vmem [resolvable:$true] %s798
          %s800 = sshll.u32 %s796, 4
          %s801 = int_to_ptr.hbm [resolvable:$true] %s800
          %803 = dma.vmem_to_hbm [thread:$0]  %s799, 16, %s801, %s755
        $region64: #{tpu_custom_call.1} parent=51 // pred_fallthru
          _
      $region52: #{tpu_custom_call.1} parent=5 // pred_fallthru
        _
      %p804 = scmp.le.s32.totalorder 2, %s23
      // Predicated region
      $region65: #{tpu_custom_call.1} parent=5 // pred_check
        %p805 = pneg %p804
      $region66: #{tpu_custom_call.1} parent=5 // pred_check_branch
        %807 = sbr.rel (%p805) target = $region68
      $region67: #{tpu_custom_call.1} parent=5 // pred_region
        %s808 = ssub.s32 %s23, 2
        // Predicated region
        $region69: #{tpu_custom_call.1} parent=67 // pred_check
          %p809 = pneg %p241
        $region70: #{tpu_custom_call.1} parent=67 // pred_check_branch
          %811 = sbr.rel (%p809) target = $region72
        $region71: #{tpu_custom_call.1} parent=67 // pred_region
          %s812 = sand.u32 %s226, 1
          %s813 = scalar_lea.sflag [#allocation3], %s812
          %s814 = sand.u32 %s226, 1
          %s815 = smul.addr %s814, 32
          %s816 = scalar_lea.vmem [#allocation2], %s815
          %818 = dma.done %s813, 512
        $region72: #{tpu_custom_call.1} parent=67 // pred_fallthru
          _
        // Predicated region
        $region73: #{tpu_custom_call.1} parent=67 // pred_check
          %p819 = pneg %p269
        $region74: #{tpu_custom_call.1} parent=67 // pred_check_branch
          %821 = sbr.rel (%p819) target = $region76
        $region75: #{tpu_custom_call.1} parent=67 // pred_region
          %s822 = sand.u32 %s29, 1
          %s823 = scalar_lea.sflag [#allocation5], %s822
          %s824 = sand.u32 %s254, 1
          %s825 = scalar_lea.vmem [#allocation4], %s824
          %827 = dma.done %s823, 16
        $region76: #{tpu_custom_call.1} parent=67 // pred_fallthru
          _
        // Predicated region
        $region77: #{tpu_custom_call.1} parent=67 // pred_check
          %p828 = pneg %p297
        $region78: #{tpu_custom_call.1} parent=67 // pred_check_branch
          %830 = sbr.rel (%p828) target = $region80
        $region79: #{tpu_custom_call.1} parent=67 // pred_region
          %s831 = sand.u32 %s29, 1
          %s832 = scalar_lea.sflag [#allocation5], %s831
          %s833 = sand.u32 %s282, 1
          %s834 = scalar_lea.vmem [#allocation6], %s833
          %836 = dma.done %s832, 16
        $region80: #{tpu_custom_call.1} parent=67 // pred_fallthru
          _
      $region68: #{tpu_custom_call.1} parent=5 // pred_fallthru
        _
    $region6: #{tpu_custom_call.1} parent=1 // loop_footer
      %s27 = sadd.s32 1, %s23
    $region7: #{tpu_custom_call.1} parent=1 // loop_footer_branch
      %22 = sbr.rel target = $region3
    $region8: #{tpu_custom_call.1} parent=1 // loop_exit
      _
    %837 = vsyncpa [#allocation3], 1
    %s838 = scalar_lea.sflag [#allocation3], 1
    %839 = vsyncpa %s838, 1
    %840 = vsyncpa [#allocation5], 1
    %s841 = scalar_lea.sflag [#allocation5], 1
    %842 = vsyncpa %s841, 1

</llo_original>
